<compile_context>
chip_gen: v7x
topology: tpu7x:2x2x1
jax: 0.10.0
libtpu: 0.0.40
codegen_flags: <defaults>
</compile_context>

<pallas_src>
import functools

import jax
import jax.numpy as jnp
from jax.experimental import pallas as pl
from jax.experimental.pallas import tpu as pltpu

BN_EPS = 1e-5
PRELU_A = 0.25  # PyTorch nn.PReLU() default init
LANE = 128


# ----------------------------------------------------------------------------
# small helpers
# ----------------------------------------------------------------------------
def _rup(n, m=LANE):
    return ((n + m - 1) // m) * m


def _pad_to(x, shape):
    return jnp.pad(x, [(0, t - s) for s, t in zip(x.shape, shape)])


def _const_map(ndim):
    return lambda i: (0,) * ndim


def _full_spec(shape):
    # Whole-array block; index_map always returns block 0 (weights stay resident).
    return pl.BlockSpec(shape, _const_map(len(shape)))


# ----------------------------------------------------------------------------
# Pallas kernels
# ----------------------------------------------------------------------------
def _bn_prelu(y, gamma, beta, a):
    """Training-mode BatchNorm1d (biased batch variance) followed by PReLU."""
    n = y.shape[0]
    mean = jnp.sum(y, axis=0, keepdims=True) * (1.0 / n)
    d = y - mean
    var = jnp.sum(d * d, axis=0, keepdims=True) * (1.0 / n)
    z = d * jax.lax.rsqrt(var + BN_EPS) * gamma + beta
    return jnp.where(z >= 0.0, z, a * z)


def _encoder_kernel(*refs, n_layers, prelu_a):
    """Fused encoder: chains n_layers of (Linear -> BN -> PReLU) in one body."""
    x_ref = refs[0]
    o_ref = refs[-1]
    p = refs[1:-1]  # 4 refs per layer: w, b, gamma, beta
    h = x_ref[...]
    for l in range(n_layers):
        w, b, g, be = p[4 * l], p[4 * l + 1], p[4 * l + 2], p[4 * l + 3]
        y = jnp.dot(h, w[...], preferred_element_type=jnp.float32) + b[...]
        h = _bn_prelu(y, g[...], be[...], prelu_a)
    o_ref[...] = h


def _decoder_kernel(*refs, n_stack, acts, n_out_pad, prelu_a):
    """Fused decoder applied to one encoded input (selected by the grid index).

    Chains the decoder stack (Linear -> BN -> PReLU) then runs ONE merged matmul
    for all 3 heads and applies the per-head activation to 128-aligned slices.
    BN statistics are computed over the current block's batch only (per input).
    """
    e_ref = refs[0]          # (1, B, L_pad) block for this grid step
    o_ref = refs[-1]         # (1, B, 3*n_out_pad) block
    p = refs[1:-1]           # 4*n_stack stack refs, then head_w, head_b
    h = e_ref[0]             # (B, L_pad)
    for l in range(n_stack):
        w, b, g, be = p[4 * l], p[4 * l + 1], p[4 * l + 2], p[4 * l + 3]
        y = jnp.dot(h, w[...], preferred_element_type=jnp.float32) + b[...]
        h = _bn_prelu(y, g[...], be[...], prelu_a)
    wh = p[4 * n_stack]
    bh = p[4 * n_stack + 1]
    y = jnp.dot(h, wh[...], preferred_element_type=jnp.float32) + bh[...]  # (B, 3*n_out_pad)
    cols = []
    for i, act in enumerate(acts):
        sl = y[:, i * n_out_pad:(i + 1) * n_out_pad]
        if act == "sigmoid":
            sl = jax.nn.sigmoid(sl)
        elif act == "relu":
            sl = jnp.maximum(sl, 0.0)
        cols.append(sl)
    o_ref[0] = jnp.concatenate(cols, axis=-1)  # single lane-dense store


# ----------------------------------------------------------------------------
# pallas_call wrappers
# ----------------------------------------------------------------------------
def encoder_forward(layers_padded, x_pad):
    """One fused pallas_call for the whole encoder. Returns padded encoding."""
    B = x_pad.shape[0]
    flat, specs = [], [_full_spec(x_pad.shape)]
    for (w, b, g, be) in layers_padded:
        for a in (w, b, g, be):
            flat.append(a)
            specs.append(_full_spec(a.shape))
    dout = layers_padded[-1][0].shape[1]
    kernel = functools.partial(
        _encoder_kernel, n_layers=len(layers_padded), prelu_a=PRELU_A)
    return pl.pallas_call(
        kernel,
        out_shape=jax.ShapeDtypeStruct((B, dout), jnp.float32),
        grid=(1,),
        in_specs=specs,
        out_specs=_full_spec((B, dout)),
        compiler_params=pltpu.CompilerParams(dimension_semantics=("arbitrary",)),
    )(x_pad, *flat)


def decoder_pair_forward(dec_p, e_stacked, acts):
    """One fused pallas_call running the decoder on BOTH encoded inputs.

    grid=(2,) over the stacked encodings; decoder weights use a constant
    index_map so they stay resident across the two steps; the grid axis is
    marked "parallel" (v7x: shards across the two TensorCores).
    """
    stack = dec_p["stack"]
    wh, bh = dec_p["head_w"], dec_p["head_b"]
    n_out_pad = dec_p["n_out_pad"]
    two, B, L = e_stacked.shape
    flat = []
    specs = [pl.BlockSpec((1, B, L), lambda i: (i, 0, 0))]
    for (w, b, g, be) in stack:
        for a in (w, b, g, be):
            flat.append(a)
            specs.append(_full_spec(a.shape))
    flat += [wh, bh]
    specs += [_full_spec(wh.shape), _full_spec(bh.shape)]

    acts3 = tuple(acts[i] if i < len(acts) else None for i in range(3))
    kernel = functools.partial(
        _decoder_kernel, n_stack=len(stack), acts=acts3,
        n_out_pad=n_out_pad, prelu_a=PRELU_A)
    return pl.pallas_call(
        kernel,
        out_shape=jax.ShapeDtypeStruct((2, B, 3 * n_out_pad), jnp.float32),
        grid=(2,),
        in_specs=specs,
        out_specs=pl.BlockSpec((1, B, 3 * n_out_pad), lambda i: (i, 0, 0)),
        compiler_params=pltpu.CompilerParams(dimension_semantics=("parallel",)),
    )(e_stacked, *flat)


# ----------------------------------------------------------------------------
# Parameter construction (mirrors module shapes / init; not a checkpoint)
# ----------------------------------------------------------------------------
def init_linear(key, din, dout):
    kw, kb = jax.random.split(key)
    limit = (6.0 / (din + dout)) ** 0.5          # xavier_uniform_
    w = jax.random.uniform(kw, (din, dout), jnp.float32, -limit, limit)
    bound = 1.0 / (din ** 0.5)                   # torch Linear default bias init
    b = jax.random.uniform(kb, (dout,), jnp.float32, -bound, bound)
    return w, b


def init_block(key, din, dout):
    w, b = init_linear(key, din, dout)
    gamma = jnp.ones((dout,), jnp.float32)       # BatchNorm1d default weight
    beta = jnp.zeros((dout,), jnp.float32)       # BatchNorm1d default bias
    return (w, b, gamma, beta)


def init_encoder(key, n_input, n_latent, hidden):
    sizes = [n_input] + hidden + [n_latent]
    keys = jax.random.split(key, len(sizes) - 1)
    return [init_block(keys[i], sizes[i], sizes[i + 1]) for i in range(len(sizes) - 1)]


def init_decoder(key, n_output, n_latent, hidden):
    sizes = [n_output] + hidden + [n_latent]
    n_stack = len(sizes) - 2
    keys = jax.random.split(key, n_stack + 3)
    stack = []
    for j, idx in enumerate(range(len(sizes) - 1, 1, -1)):
        stack.append(init_block(keys[j], sizes[idx], sizes[idx - 1]))
    n_inter = sizes[-2]
    heads = [init_linear(keys[n_stack + i], n_inter, n_output) for i in range(3)]
    return {"stack": stack, "heads": heads, "n_output": n_output}


# ---- padding to lane-dense (multiple-of-128) feature dims -------------------
def _pad_block(w, b, gamma, beta):
    din, dout = w.shape
    dp, op = _rup(din), _rup(dout)
    return (_pad_to(w, (dp, op)),
            _pad_to(b.reshape(1, -1), (1, op)),
            _pad_to(gamma.reshape(1, -1), (1, op)),
            _pad_to(beta.reshape(1, -1), (1, op)))


def pad_encoder(enc):
    return [_pad_block(*blk) for blk in enc]


def pad_decoder(dec):
    stack_p = [_pad_block(*blk) for blk in dec["stack"]]
    n_inter, n_out = dec["heads"][0][0].shape
    ip, op = _rup(n_inter), _rup(n_out)
    head_w = jnp.concatenate([_pad_to(w, (ip, op)) for (w, _) in dec["heads"]], axis=1)
    head_b = jnp.concatenate([_pad_to(b.reshape(1, -1), (1, op)) for (_, b) in dec["heads"]],
                             axis=1)
    return {"stack": stack_p, "head_w": head_w, "head_b": head_b,
            "n_out_pad": op, "n_out": n_out}


# ----------------------------------------------------------------------------
# Forward pass (4 pallas_call launches total)
# ----------------------------------------------------------------------------
def naive_spliced_autoencoder_forward(params, x):
    x1, x2 = x
    B = x1.shape[0]
    x1p = _pad_to(x1, (B, _rup(x1.shape[1])))
    x2p = _pad_to(x2, (B, _rup(x2.shape[1])))

    e1p = encoder_forward(params["encoder1_p"], x1p)   # (B, L_pad)
    e2p = encoder_forward(params["encoder2_p"], x2p)
    n_latent = params["n_latent"]
    e1 = e1p[:, :n_latent]
    e2 = e2p[:, :n_latent]

    e_stacked = jnp.stack([e1p, e2p], axis=0)           # (2, B, L_pad)

    d1 = decoder_pair_forward(params["decoder1_p"], e_stacked, params["acts1"])
    d2 = decoder_pair_forward(params["decoder2_p"], e_stacked, params["acts2"])

    def heads(out_row, dec_p):
        op, no = dec_p["n_out_pad"], dec_p["n_out"]
        return tuple(out_row[:, i * op:i * op + no] for i in range(3))

    retval11 = (*heads(d1[0], params["decoder1_p"]), e1)
    retval12 = (*heads(d2[0], params["decoder2_p"]), e1)
    retval21 = (*heads(d1[1], params["decoder1_p"]), e2)
    retval22 = (*heads(d2[1], params["decoder2_p"]), e2)
    return (retval11, retval12, retval21, retval22)


# ----------------------------------------------------------------------------
# Pure-JAX reference (unpadded) for correctness check
# ----------------------------------------------------------------------------
def _ref_block(x, w, b, gamma, beta):
    y = x @ w + b
    mean = jnp.mean(y, axis=0, keepdims=True)
    var = jnp.mean((y - mean) ** 2, axis=0, keepdims=True)
    z = (y - mean) / jnp.sqrt(var + BN_EPS) * gamma + beta
    return jnp.where(z >= 0.0, z, PRELU_A * z)


def _ref_linear(x, w, b, act):
    y = x @ w + b
    if act == "sigmoid":
        return jax.nn.sigmoid(y)
    if act == "relu":
        return jnp.maximum(y, 0.0)
    return y


def reference_forward(raw, x):
    x1, x2 = x

    def enc(p, v):
        for blk in p:
            v = _ref_block(v, *blk)
        return v

    def dec(p, z, acts):
        h = z
        for blk in p["stack"]:
            h = _ref_block(h, *blk)
        return tuple(
            _ref_linear(h, w, b, acts[i] if i < len(acts) else None)
            for i, (w, b) in enumerate(p["heads"]))

    e1 = enc(raw["encoder1"], x1)
    e2 = enc(raw["encoder2"], x2)
    a1, a2 = raw["acts1"], raw["acts2"]
    return (
        (*dec(raw["decoder1"], e1, a1), e1),
        (*dec(raw["decoder2"], e1, a2), e1),
        (*dec(raw["decoder1"], e2, a1), e2),
        (*dec(raw["decoder2"], e2, a2), e2),
    )


# ----------------------------------------------------------------------------
if __name__ == "__main__":
    key = jax.random.PRNGKey(0)
    k_e1, k_e2, k_d1, k_d2, k_x1, k_x2 = jax.random.split(key, 6)

    # Small shapes consistent with the module: a single hidden layer size
    # (the module's Decoder wiring is only self-consistent for one hidden layer).
    B = 8            # batch (>1 required for training-mode BatchNorm1d)
    input_dim1 = 16
    input_dim2 = 12
    hidden = [32]    # layer_sizes
    n_latent = 8

    raw = {
        "encoder1": init_encoder(k_e1, input_dim1, n_latent, hidden),
        "encoder2": init_encoder(k_e2, input_dim2, n_latent, hidden),
        "decoder1": init_decoder(k_d1, input_dim1, n_latent, hidden),
        "decoder2": init_decoder(k_d2, input_dim2, n_latent, hidden),
        # final_activation1 = nn.Sigmoid()              -> only 'act1'
        # final_activation2 = [nn.Sigmoid(), nn.ReLU()] -> 'act1', 'act2'
        "acts1": ("sigmoid",),
        "acts2": ("sigmoid", "relu"),
    }

    params = {
        "encoder1_p": pad_encoder(raw["encoder1"]),
        "encoder2_p": pad_encoder(raw["encoder2"]),
        "decoder1_p": pad_decoder(raw["decoder1"]),
        "decoder2_p": pad_decoder(raw["decoder2"]),
        "acts1": raw["acts1"],
        "acts2": raw["acts2"],
        "n_latent": n_latent,
    }

    x1 = jax.random.normal(k_x1, (B, input_dim1), jnp.float32)
    x2 = jax.random.normal(k_x2, (B, input_dim2), jnp.float32)

    out = naive_spliced_autoencoder_forward(params, (x1, x2))
    out = jax.tree_util.tree_map(jax.block_until_ready, out)

    # correctness check against the pure-JAX (unpadded) reference
    ref = reference_forward(raw, (x1, x2))
    for got_t, ref_t in zip(out, ref):
        for got, exp in zip(got_t, ref_t):
            assert got.shape == exp.shape and got.dtype == exp.dtype
            assert jnp.max(jnp.abs(got - exp)) < 1e-4, "mismatch vs reference"

    print("KERNEL_OK")
</pallas_src>

<mosaic_0001>
module attributes {stable_mosaic.version = 11 : i64} {
  func.func @_encoder_kernel(%arg0: i32, %arg1: memref<8x128xf32, #tpu.memory_space<vmem>>, %arg2: memref<128x128xf32, #tpu.memory_space<vmem>>, %arg3: memref<1x128xf32, #tpu.memory_space<vmem>>, %arg4: memref<1x128xf32, #tpu.memory_space<vmem>>, %arg5: memref<1x128xf32, #tpu.memory_space<vmem>>, %arg6: memref<128x128xf32, #tpu.memory_space<vmem>>, %arg7: memref<1x128xf32, #tpu.memory_space<vmem>>, %arg8: memref<1x128xf32, #tpu.memory_space<vmem>>, %arg9: memref<1x128xf32, #tpu.memory_space<vmem>>, %arg10: memref<8x128xf32, #tpu.memory_space<vmem>>) attributes {dimension_semantics = [#tpu.dimension_semantics<arbitrary>], iteration_bounds = array<i64: 1>, scalar_prefetch = 0 : i64, scratch_operands = 0 : i64, tpu.core_type = #tpu.core_type<tc>, window_params = [{pipeline_mode = #tpu.pipeline_mode<synchronous>, transform_indices = @transform_0, window_bounds = array<i64: 8, 128>}, {pipeline_mode = #tpu.pipeline_mode<synchronous>, transform_indices = @transform_1, window_bounds = array<i64: 128, 128>}, {pipeline_mode = #tpu.pipeline_mode<synchronous>, transform_indices = @transform_2, window_bounds = array<i64: 1, 128>}, {pipeline_mode = #tpu.pipeline_mode<synchronous>, transform_indices = @transform_3, window_bounds = array<i64: 1, 128>}, {pipeline_mode = #tpu.pipeline_mode<synchronous>, transform_indices = @transform_4, window_bounds = array<i64: 1, 128>}, {pipeline_mode = #tpu.pipeline_mode<synchronous>, transform_indices = @transform_5, window_bounds = array<i64: 128, 128>}, {pipeline_mode = #tpu.pipeline_mode<synchronous>, transform_indices = @transform_6, window_bounds = array<i64: 1, 128>}, {pipeline_mode = #tpu.pipeline_mode<synchronous>, transform_indices = @transform_7, window_bounds = array<i64: 1, 128>}, {pipeline_mode = #tpu.pipeline_mode<synchronous>, transform_indices = @transform_8, window_bounds = array<i64: 1, 128>}, {pipeline_mode = #tpu.pipeline_mode<synchronous>, transform_indices = @transform_9, window_bounds = array<i64: 8, 128>}]} {
    %c0 = arith.constant 0 : index
    %c0_0 = arith.constant 0 : index
    %0 = vector.load %arg1[%c0, %c0_0] : memref<8x128xf32, #tpu.memory_space<vmem>>, vector<8x128xf32>
    %c0_1 = arith.constant 0 : index
    %c0_2 = arith.constant 0 : index
    %1 = vector.load %arg2[%c0_1, %c0_2] : memref<128x128xf32, #tpu.memory_space<vmem>>, vector<128x128xf32>
    %cst = arith.constant dense<0.000000e+00> : vector<8x128xf32>
    %2 = tpu.matmul %0, %1, %cst {dimension_numbers = #tpu.dot_dimension_numbers<[1], [0], [0], [1], [0, 0, 1, 1], [], []>} : vector<8x128xf32>, vector<128x128xf32>, vector<8x128xf32> -> vector<8x128xf32>
    %c0_3 = arith.constant 0 : index
    %c0_4 = arith.constant 0 : index
    %3 = vector.load %arg3[%c0_3, %c0_4] : memref<1x128xf32, #tpu.memory_space<vmem>>, vector<1x128xf32>
    %4 = vector.broadcast %3 : vector<1x128xf32> to vector<8x128xf32>
    %5 = arith.addf %2, %4 : vector<8x128xf32>
    %c0_5 = arith.constant 0 : index
    %c0_6 = arith.constant 0 : index
    %6 = vector.load %arg4[%c0_5, %c0_6] : memref<1x128xf32, #tpu.memory_space<vmem>>, vector<1x128xf32>
    %c0_7 = arith.constant 0 : index
    %c0_8 = arith.constant 0 : index
    %7 = vector.load %arg5[%c0_7, %c0_8] : memref<1x128xf32, #tpu.memory_space<vmem>>, vector<1x128xf32>
    %cst_9 = arith.constant dense<0.000000e+00> : vector<128xf32>
    %8 = vector.multi_reduction <add>, %5, %cst_9 [0] : vector<8x128xf32> to vector<128xf32>
    %9 = vector.shape_cast %8 : vector<128xf32> to vector<1x128xf32>
    %cst_10 = arith.constant 1.250000e-01 : f32
    %10 = vector.broadcast %cst_10 : f32 to vector<1x128xf32>
    %11 = arith.mulf %9, %10 : vector<1x128xf32>
    %12 = vector.broadcast %11 : vector<1x128xf32> to vector<8x128xf32>
    %13 = arith.subf %5, %12 : vector<8x128xf32>
    %14 = arith.mulf %13, %13 : vector<8x128xf32>
    %cst_11 = arith.constant dense<0.000000e+00> : vector<128xf32>
    %15 = vector.multi_reduction <add>, %14, %cst_11 [0] : vector<8x128xf32> to vector<128xf32>
    %16 = vector.shape_cast %15 : vector<128xf32> to vector<1x128xf32>
    %cst_12 = arith.constant 1.250000e-01 : f32
    %17 = vector.broadcast %cst_12 : f32 to vector<1x128xf32>
    %18 = arith.mulf %16, %17 : vector<1x128xf32>
    %cst_13 = arith.constant 9.99999974E-6 : f32
    %19 = vector.broadcast %cst_13 : f32 to vector<1x128xf32>
    %20 = arith.addf %18, %19 : vector<1x128xf32>
    %21 = math.rsqrt %20 : vector<1x128xf32>
    %22 = vector.broadcast %21 : vector<1x128xf32> to vector<8x128xf32>
    %23 = arith.mulf %13, %22 : vector<8x128xf32>
    %24 = vector.broadcast %6 : vector<1x128xf32> to vector<8x128xf32>
    %25 = arith.mulf %23, %24 : vector<8x128xf32>
    %26 = vector.broadcast %7 : vector<1x128xf32> to vector<8x128xf32>
    %27 = arith.addf %25, %26 : vector<8x128xf32>
    %cst_14 = arith.constant 0.000000e+00 : f32
    %28 = vector.broadcast %cst_14 : f32 to vector<8x128xf32>
    %29 = arith.cmpf oge, %27, %28 : vector<8x128xf32>
    %cst_15 = arith.constant 2.500000e-01 : f32
    %30 = vector.broadcast %cst_15 : f32 to vector<8x128xf32>
    %31 = arith.mulf %30, %27 : vector<8x128xf32>
    %32 = arith.select %29, %27, %31 : vector<8x128xi1>, vector<8x128xf32>
    %c0_16 = arith.constant 0 : index
    %c0_17 = arith.constant 0 : index
    %33 = vector.load %arg6[%c0_16, %c0_17] : memref<128x128xf32, #tpu.memory_space<vmem>>, vector<128x128xf32>
    %cst_18 = arith.constant dense<0.000000e+00> : vector<8x128xf32>
    %34 = tpu.matmul %32, %33, %cst_18 {dimension_numbers = #tpu.dot_dimension_numbers<[1], [0], [0], [1], [0, 0, 1, 1], [], []>} : vector<8x128xf32>, vector<128x128xf32>, vector<8x128xf32> -> vector<8x128xf32>
    %c0_19 = arith.constant 0 : index
    %c0_20 = arith.constant 0 : index
    %35 = vector.load %arg7[%c0_19, %c0_20] : memref<1x128xf32, #tpu.memory_space<vmem>>, vector<1x128xf32>
    %36 = vector.broadcast %35 : vector<1x128xf32> to vector<8x128xf32>
    %37 = arith.addf %34, %36 : vector<8x128xf32>
    %c0_21 = arith.constant 0 : index
    %c0_22 = arith.constant 0 : index
    %38 = vector.load %arg8[%c0_21, %c0_22] : memref<1x128xf32, #tpu.memory_space<vmem>>, vector<1x128xf32>
    %c0_23 = arith.constant 0 : index
    %c0_24 = arith.constant 0 : index
    %39 = vector.load %arg9[%c0_23, %c0_24] : memref<1x128xf32, #tpu.memory_space<vmem>>, vector<1x128xf32>
    %cst_25 = arith.constant dense<0.000000e+00> : vector<128xf32>
    %40 = vector.multi_reduction <add>, %37, %cst_25 [0] : vector<8x128xf32> to vector<128xf32>
    %41 = vector.shape_cast %40 : vector<128xf32> to vector<1x128xf32>
    %cst_26 = arith.constant 1.250000e-01 : f32
    %42 = vector.broadcast %cst_26 : f32 to vector<1x128xf32>
    %43 = arith.mulf %41, %42 : vector<1x128xf32>
    %44 = vector.broadcast %43 : vector<1x128xf32> to vector<8x128xf32>
    %45 = arith.subf %37, %44 : vector<8x128xf32>
    %46 = arith.mulf %45, %45 : vector<8x128xf32>
    %cst_27 = arith.constant dense<0.000000e+00> : vector<128xf32>
    %47 = vector.multi_reduction <add>, %46, %cst_27 [0] : vector<8x128xf32> to vector<128xf32>
    %48 = vector.shape_cast %47 : vector<128xf32> to vector<1x128xf32>
    %cst_28 = arith.constant 1.250000e-01 : f32
    %49 = vector.broadcast %cst_28 : f32 to vector<1x128xf32>
    %50 = arith.mulf %48, %49 : vector<1x128xf32>
    %cst_29 = arith.constant 9.99999974E-6 : f32
    %51 = vector.broadcast %cst_29 : f32 to vector<1x128xf32>
    %52 = arith.addf %50, %51 : vector<1x128xf32>
    %53 = math.rsqrt %52 : vector<1x128xf32>
    %54 = vector.broadcast %53 : vector<1x128xf32> to vector<8x128xf32>
    %55 = arith.mulf %45, %54 : vector<8x128xf32>
    %56 = vector.broadcast %38 : vector<1x128xf32> to vector<8x128xf32>
    %57 = arith.mulf %55, %56 : vector<8x128xf32>
    %58 = vector.broadcast %39 : vector<1x128xf32> to vector<8x128xf32>
    %59 = arith.addf %57, %58 : vector<8x128xf32>
    %cst_30 = arith.constant 0.000000e+00 : f32
    %60 = vector.broadcast %cst_30 : f32 to vector<8x128xf32>
    %61 = arith.cmpf oge, %59, %60 : vector<8x128xf32>
    %cst_31 = arith.constant 2.500000e-01 : f32
    %62 = vector.broadcast %cst_31 : f32 to vector<8x128xf32>
    %63 = arith.mulf %62, %59 : vector<8x128xf32>
    %64 = arith.select %61, %59, %63 : vector<8x128xi1>, vector<8x128xf32>
    %c0_32 = arith.constant 0 : index
    %c0_33 = arith.constant 0 : index
    %65 = vector.load %arg10[%c0_32, %c0_33] : memref<8x128xf32, #tpu.memory_space<vmem>>, vector<8x128xf32>
    tpu.vector_store %arg10[%c0_32, %c0_33], %64 {strides = array<i32>} : memref<8x128xf32, #tpu.memory_space<vmem>>, vector<8x128xf32>,
    return
  }
  func.func @transform_0(%arg0: i32) -> (i32, i32) {
    %c0_i32 = arith.constant 0 : i32
    %c0_i32_0 = arith.constant 0 : i32
    %c0_i32_1 = arith.constant 0 : i32
    return %c0_i32, %c0_i32_0 : i32, i32
  }
  func.func @transform_1(%arg0: i32) -> (i32, i32) {
    %c0_i32 = arith.constant 0 : i32
    %c0_i32_0 = arith.constant 0 : i32
    %c0_i32_1 = arith.constant 0 : i32
    return %c0_i32, %c0_i32_0 : i32, i32
  }
  func.func @transform_2(%arg0: i32) -> (i32, i32) {
    %c0_i32 = arith.constant 0 : i32
    %c0_i32_0 = arith.constant 0 : i32
    %c0_i32_1 = arith.constant 0 : i32
    return %c0_i32, %c0_i32_0 : i32, i32
  }
  func.func @transform_3(%arg0: i32) -> (i32, i32) {
    %c0_i32 = arith.constant 0 : i32
    %c0_i32_0 = arith.constant 0 : i32
    %c0_i32_1 = arith.constant 0 : i32
    return %c0_i32, %c0_i32_0 : i32, i32
  }
  func.func @transform_4(%arg0: i32) -> (i32, i32) {
    %c0_i32 = arith.constant 0 : i32
    %c0_i32_0 = arith.constant 0 : i32
    %c0_i32_1 = arith.constant 0 : i32
    return %c0_i32, %c0_i32_0 : i32, i32
  }
  func.func @transform_5(%arg0: i32) -> (i32, i32) {
    %c0_i32 = arith.constant 0 : i32
    %c0_i32_0 = arith.constant 0 : i32
    %c0_i32_1 = arith.constant 0 : i32
    return %c0_i32, %c0_i32_0 : i32, i32
  }
  func.func @transform_6(%arg0: i32) -> (i32, i32) {
    %c0_i32 = arith.constant 0 : i32
    %c0_i32_0 = arith.constant 0 : i32
    %c0_i32_1 = arith.constant 0 : i32
    return %c0_i32, %c0_i32_0 : i32, i32
  }
  func.func @transform_7(%arg0: i32) -> (i32, i32) {
    %c0_i32 = arith.constant 0 : i32
    %c0_i32_0 = arith.constant 0 : i32
    %c0_i32_1 = arith.constant 0 : i32
    return %c0_i32, %c0_i32_0 : i32, i32
  }
  func.func @transform_8(%arg0: i32) -> (i32, i32) {
    %c0_i32 = arith.constant 0 : i32
    %c0_i32_0 = arith.constant 0 : i32
    %c0_i32_1 = arith.constant 0 : i32
    return %c0_i32, %c0_i32_0 : i32, i32
  }
  func.func @transform_9(%arg0: i32) -> (i32, i32) {
    %c0_i32 = arith.constant 0 : i32
    %c0_i32_0 = arith.constant 0 : i32
    %c0_i32_1 = arith.constant 0 : i32
    return %c0_i32, %c0_i32_0 : i32, i32
  }
}

</mosaic_0001>

<llo_original>
// kernel: tpu_custom_call.1
$region0: #{tpu_custom_call.1}
  #allocation0 [shape = 'u32[]', space=smem, size = 0x4, offset = 0x4, fixed_abs, tag = 'smem constant byte address 0x4 - core index']
  #allocation1 [shape = 'u32[144,128]{1,0:T(1,128)}', space=vmem, size = 0x12000, scoped, tag = 'internal scratch']
  %s0 = inlined_call_operand.hbm [shape: f32[8,128], index: 0, kind: input, shape index: {}]
  %s1 = inlined_call_operand.hbm [shape: f32[128,128], index: 1, kind: input, shape index: {}]
  %s2 = inlined_call_operand.vmem [shape: f32[1,128], index: 2, kind: input, shape index: {}]
  %s3 = inlined_call_operand.vmem [shape: f32[1,128], index: 3, kind: input, shape index: {}]
  %s4 = inlined_call_operand.vmem [shape: f32[1,128], index: 4, kind: input, shape index: {}]
  %s5 = inlined_call_operand.hbm [shape: f32[128,128], index: 5, kind: input, shape index: {}]
  %s6 = inlined_call_operand.vmem [shape: f32[1,128], index: 6, kind: input, shape index: {}]
  %s7 = inlined_call_operand.vmem [shape: f32[1,128], index: 7, kind: input, shape index: {}]
  %s8 = inlined_call_operand.vmem [shape: f32[1,128], index: 8, kind: input, shape index: {}]
  %s9 = inlined_call_operand.hbm [shape: f32[8,128], index: 9, kind: output, shape index: {}]
  %s10 = sld [smem:[#allocation0]]
  $region58: #{tpu_custom_call.1} parent=0
    _
  %s12 = ssub.s32 1, %s10
  %s13 = scalar_select 0, %s12, %s10
  $region1: #{tpu_custom_call.1} parent=0
    #allocation2 [shape = 'u8[4096]{0}', space=vmem, size = 0x1000, scoped, tag = 'input window, operand 0, single buffered']
    #allocation3 [shape = 's32[1]{0}', space=sflag, size = 0x4, scoped, tag = 'scoped memory for tpu_custom_call.1']
    #allocation4 [shape = 's32[1]{0}', space=sflag, size = 0x4, scoped, tag = 'scoped memory for tpu_custom_call.1']
    #allocation5 [shape = 'u8[65536]{0}', space=vmem, size = 0x10000, scoped, tag = 'input window, operand 1, single buffered']
    #allocation6 [shape = 's32[1]{0}', space=sflag, size = 0x4, scoped, tag = 'scoped memory for tpu_custom_call.1']
    #allocation7 [shape = 'u8[65536]{0}', space=vmem, size = 0x10000, scoped, tag = 'input window, operand 5, single buffered']
    #allocation8 [shape = 'u8[4096]{0}', space=vmem, size = 0x1000, scoped, tag = 'output window, operand 0, single buffered']
    %14 = vsyncpa [#allocation3], 0
    %15 = vsyncpa [#allocation6], 0
    %16 = vsyncpa [#allocation4], 0
    // Predicated region
    $region2: #{tpu_custom_call.1} parent=1 // pred_check
      _
    $region3: #{tpu_custom_call.1} parent=1 // pred_check_branch
      %18 = sbr.rel (0) target = $region5
    $region4: #{tpu_custom_call.1} parent=1 // pred_region
      %s20 = ssub.s32 128, 128
      %21 = vsyncadd [#allocation3], %s20
      %s23 = sshll.u32 [#allocation2], 4
      %s24 = int_to_ptr.vmem [resolvable:$true] %s23
      %26 = dma.hbm_to_vmem [thread:$0]  %s0, 128, %s24, [#allocation3]
    $region5: #{tpu_custom_call.1} parent=1 // pred_fallthru
      _
    // Predicated region
    $region6: #{tpu_custom_call.1} parent=1 // pred_check
      _
    $region7: #{tpu_custom_call.1} parent=1 // pred_check_branch
      %28 = sbr.rel (0) target = $region9
    $region8: #{tpu_custom_call.1} parent=1 // pred_region
      %s30 = ssub.s32 2048, 2048
      %31 = vsyncadd [#allocation6], %s30
      %s32 = sshll.u32 [#allocation5], 4
      %s33 = int_to_ptr.vmem [resolvable:$true] %s32
      %38 = dma.hbm_to_vmem [thread:$0]  %s1, 2048, %s33, [#allocation6], 128, 128, 8
    $region9: #{tpu_custom_call.1} parent=1 // pred_fallthru
      _
    // Predicated region
    $region10: #{tpu_custom_call.1} parent=1 // pred_check
      _
    $region11: #{tpu_custom_call.1} parent=1 // pred_check_branch
      %40 = sbr.rel (0) target = $region13
    $region12: #{tpu_custom_call.1} parent=1 // pred_region
      _
    $region13: #{tpu_custom_call.1} parent=1 // pred_fallthru
      _
    // Predicated region
    $region14: #{tpu_custom_call.1} parent=1 // pred_check
      _
    $region15: #{tpu_custom_call.1} parent=1 // pred_check_branch
      %42 = sbr.rel (0) target = $region17
    $region16: #{tpu_custom_call.1} parent=1 // pred_region
      _
    $region17: #{tpu_custom_call.1} parent=1 // pred_fallthru
      _
    // Predicated region
    $region18: #{tpu_custom_call.1} parent=1 // pred_check
      _
    $region19: #{tpu_custom_call.1} parent=1 // pred_check_branch
      %44 = sbr.rel (0) target = $region21
    $region20: #{tpu_custom_call.1} parent=1 // pred_region
      _
    $region21: #{tpu_custom_call.1} parent=1 // pred_fallthru
      _
    // Predicated region
    $region22: #{tpu_custom_call.1} parent=1 // pred_check
      _
    $region23: #{tpu_custom_call.1} parent=1 // pred_check_branch
      %46 = sbr.rel (0) target = $region25
    $region24: #{tpu_custom_call.1} parent=1 // pred_region
      %s48 = ssub.s32 2048, 2048
      %49 = vsyncadd [#allocation6], %s48
      %s50 = sshll.u32 [#allocation7], 4
      %s51 = int_to_ptr.vmem [resolvable:$true] %s50
      %56 = dma.hbm_to_vmem [thread:$0]  %s5, 2048, %s51, [#allocation6], 128, 128, 8
    $region25: #{tpu_custom_call.1} parent=1 // pred_fallthru
      _
    // Predicated region
    $region26: #{tpu_custom_call.1} parent=1 // pred_check
      _
    $region27: #{tpu_custom_call.1} parent=1 // pred_check_branch
      %58 = sbr.rel (0) target = $region29
    $region28: #{tpu_custom_call.1} parent=1 // pred_region
      _
    $region29: #{tpu_custom_call.1} parent=1 // pred_fallthru
      _
    // Predicated region
    $region30: #{tpu_custom_call.1} parent=1 // pred_check
      _
    $region31: #{tpu_custom_call.1} parent=1 // pred_check_branch
      %60 = sbr.rel (0) target = $region33
    $region32: #{tpu_custom_call.1} parent=1 // pred_region
      _
    $region33: #{tpu_custom_call.1} parent=1 // pred_fallthru
      _
    // Predicated region
    $region34: #{tpu_custom_call.1} parent=1 // pred_check
      _
    $region35: #{tpu_custom_call.1} parent=1 // pred_check_branch
      %62 = sbr.rel (0) target = $region37
    $region36: #{tpu_custom_call.1} parent=1 // pred_region
      _
    $region37: #{tpu_custom_call.1} parent=1 // pred_fallthru
      _
    // Predicated region
    $region38: #{tpu_custom_call.1} parent=1 // pred_check
      _
    $region39: #{tpu_custom_call.1} parent=1 // pred_check_branch
      %64 = sbr.rel (0) target = $region41
    $region40: #{tpu_custom_call.1} parent=1 // pred_region
      %65 = dma.done [#allocation3], 128
    $region41: #{tpu_custom_call.1} parent=1 // pred_fallthru
      _
    // Predicated region
    $region42: #{tpu_custom_call.1} parent=1 // pred_check
      _
    $region43: #{tpu_custom_call.1} parent=1 // pred_check_branch
      %67 = sbr.rel (0) target = $region45
    $region44: #{tpu_custom_call.1} parent=1 // pred_region
      %68 = dma.done [#allocation6], 2048
    $region45: #{tpu_custom_call.1} parent=1 // pred_fallthru
      _
    // Predicated region
    $region46: #{tpu_custom_call.1} parent=1 // pred_check
      _
    $region47: #{tpu_custom_call.1} parent=1 // pred_check_branch
      %70 = sbr.rel (0) target = $region49
    $region48: #{tpu_custom_call.1} parent=1 // pred_region
      %71 = dma.done [#allocation6], 2048
    $region49: #{tpu_custom_call.1} parent=1 // pred_fallthru
      _
    %v72 = vld [vmem:[#allocation2] sm:$0xff]
    %v73 = vld [vmem:[#allocation5] sm:$0xff]
    %v74 = vld [vmem:[#allocation5 + $0x8] sm:$0xff]
    %v75 = vld [vmem:[#allocation5 + $0x10] sm:$0xff]
    %v76 = vld [vmem:[#allocation5 + $0x18] sm:$0xff]
    %v77 = vld [vmem:[#allocation5 + $0x20] sm:$0xff]
    %v78 = vld [vmem:[#allocation5 + $0x28] sm:$0xff]
    %v79 = vld [vmem:[#allocation5 + $0x30] sm:$0xff]
    %v80 = vld [vmem:[#allocation5 + $0x38] sm:$0xff]
    %v81 = vld [vmem:[#allocation5 + $0x40] sm:$0xff]
    %v82 = vld [vmem:[#allocation5 + $0x48] sm:$0xff]
    %v83 = vld [vmem:[#allocation5 + $0x50] sm:$0xff]
    %v84 = vld [vmem:[#allocation5 + $0x58] sm:$0xff]
    %v85 = vld [vmem:[#allocation5 + $0x60] sm:$0xff]
    %v86 = vld [vmem:[#allocation5 + $0x68] sm:$0xff]
    %v87 = vld [vmem:[#allocation5 + $0x70] sm:$0xff]
    %v88 = vld [vmem:[#allocation5 + $0x78] sm:$0xff]
    %v89 = vld [vmem:[%s2] sm:$0x1]
    %v91 = vlaneseq
    %v92 = vshrl.u32 %v91, 7
    %v93 = vsub.s32 0, %v92
    %v94 = vrot.slane %v89, %v93
    %96 = vmatprep.subr.mxu0 0.0
    %97 = vmatpush1.msra.mxu0 %v73
    %98 = vmatprep.subr.mxu0 0.0
    %99 = vmatpush1.msra.mxu0 %v74
    %100 = vmatprep.subr.mxu0 0.0
    %101 = vmatpush1.msra.mxu0 %v75
    %102 = vmatprep.subr.mxu0 0.0
    %103 = vmatpush1.msra.mxu0 %v76
    %104 = vmatprep.subr.mxu0 0.0
    %105 = vmatpush1.msra.mxu0 %v77
    %106 = vmatprep.subr.mxu0 0.0
    %107 = vmatpush1.msra.mxu0 %v78
    %108 = vmatprep.subr.mxu0 0.0
    %109 = vmatpush1.msra.mxu0 %v79
    %110 = vmatprep.subr.mxu0 0.0
    %111 = vmatpush1.msra.mxu0 %v80
    %112 = vmatprep.subr.mxu0 0.0
    %113 = vmatpush1.msra.mxu0 %v81
    %114 = vmatprep.subr.mxu0 0.0
    %115 = vmatpush1.msra.mxu0 %v82
    %116 = vmatprep.subr.mxu0 0.0
    %117 = vmatpush1.msra.mxu0 %v83
    %118 = vmatprep.subr.mxu0 0.0
    %119 = vmatpush1.msra.mxu0 %v84
    %120 = vmatprep.subr.mxu0 0.0
    %121 = vmatpush1.msra.mxu0 %v85
    %122 = vmatprep.subr.mxu0 0.0
    %123 = vmatpush1.msra.mxu0 %v86
    %124 = vmatprep.subr.mxu0 0.0
    %125 = vmatpush1.msra.mxu0 %v87
    %126 = vmatprep.subr.mxu0 0.0
    %127 = vmatpush1.msra.mxu0 %v88
    %128 = vmatprep.subr.mxu0 0.0
    %129 = vmatpush1.msra.mxu0 0.0
    %130 = vmatprep.subr.mxu0 0.0
    %131 = vmatpush1.msra.mxu0 0.0
    %132 = vmatprep.subr.mxu0 0.0
    %133 = vmatpush1.msra.mxu0 0.0
    %134 = vmatprep.subr.mxu0 0.0
    %135 = vmatpush1.msra.mxu0 0.0
    %136 = vmatprep.subr.mxu0 0.0
    %137 = vmatpush1.msra.mxu0 0.0
    %138 = vmatprep.subr.mxu0 0.0
    %139 = vmatpush1.msra.mxu0 0.0
    %140 = vmatprep.subr.mxu0 0.0
    %141 = vmatpush1.msra.mxu0 0.0
    %142 = vmatprep.subr.mxu0 0.0
    %143 = vmatpush1.msra.mxu0 0.0
    %144 = vmatprep.subr.mxu0 0.0
    %145 = vmatpush1.msra.mxu0 0.0
    %146 = vmatprep.subr.mxu0 0.0
    %147 = vmatpush1.msra.mxu0 0.0
    %148 = vmatprep.subr.mxu0 0.0
    %149 = vmatpush1.msra.mxu0 0.0
    %150 = vmatprep.subr.mxu0 0.0
    %151 = vmatpush1.msra.mxu0 0.0
    %152 = vmatprep.subr.mxu0 0.0
    %153 = vmatpush1.msra.mxu0 0.0
    %154 = vmatprep.subr.mxu0 0.0
    %155 = vmatpush1.msra.mxu0 0.0
    %156 = vmatprep.subr.mxu0 0.0
    %157 = vmatpush1.msra.mxu0 0.0
    %158 = vmatprep.subr.mxu0 0.0
    %159 = vmatpush1.msra.mxu0 0.0
    %160 = vmatprep.mubr.f32.mxu0 0.0
    %161 = vmatmul.mubr.f32.gmra.mrb[0].mxu0 %v72
    %v162 = vpop.f32.mrb[0].mxu0
    %v163 = vadd.f32 %v94, %v162
    %v164 = vpop.f32.mrb[0].mxu0
    %165 = vdwg.mxu0
    %v166 = vld [vmem:[%s3] sm:$0x1]
    %v167 = vld [vmem:[%s4] sm:$0x1]
    %v168 = vrot.slane %v163, 4
    %v169 = vadd.f32 %v163, %v168
    %v170 = vrot.slane %v169, 2
    %v171 = vadd.f32 %v169, %v170
    %v172 = vrot.slane %v171, 1
    %v173 = vadd.f32 %v171, %v172
    %v174 = vmul.f32 %v173, 0.125
    %v175 = vsub.f32 %v163, %v174
    %v176 = vmul.f32 %v175, %v175
    %v177 = vrot.slane %v176, 4
    %v178 = vadd.f32 %v176, %v177
    %v179 = vrot.slane %v178, 2
    %v180 = vadd.f32 %v178, %v179
    %v181 = vrot.slane %v180, 1
    %v182 = vadd.f32 %v180, %v181
    %v183 = vmul.f32 %v182, 0.125
    %v184 = vadd.f32 %v183, 1e-05
    %v185 = vrsqrt.pop %v184
    %v186 = vmul.f32 %v175, %v185
    %v188 = vlaneseq
    %v189 = vshrl.u32 %v188, 7
    %v190 = vsub.s32 0, %v189
    %v191 = vrot.slane %v166, %v190
    %v193 = vmul.f32 %v186, %v191
    %v195 = vlaneseq
    %v196 = vshrl.u32 %v195, 7
    %v197 = vsub.s32 0, %v196
    %v198 = vrot.slane %v167, %v197
    %v200 = vadd.f32 %v193, %v198
    %vm201 = vcmp.ge.f32.partialorder %v200, 0.0
    %v202 = vmul.f32 %v200, 0.25
    %v203 = vsel %vm201, %v200, %v202
    %v204 = vld [vmem:[#allocation7] sm:$0xff]
    %v205 = vld [vmem:[#allocation7 + $0x8] sm:$0xff]
    %v206 = vld [vmem:[#allocation7 + $0x10] sm:$0xff]
    %v207 = vld [vmem:[#allocation7 + $0x18] sm:$0xff]
    %v208 = vld [vmem:[#allocation7 + $0x20] sm:$0xff]
    %v209 = vld [vmem:[#allocation7 + $0x28] sm:$0xff]
    %v210 = vld [vmem:[#allocation7 + $0x30] sm:$0xff]
    %v211 = vld [vmem:[#allocation7 + $0x38] sm:$0xff]
    %v212 = vld [vmem:[#allocation7 + $0x40] sm:$0xff]
    %v213 = vld [vmem:[#allocation7 + $0x48] sm:$0xff]
    %v214 = vld [vmem:[#allocation7 + $0x50] sm:$0xff]
    %v215 = vld [vmem:[#allocation7 + $0x58] sm:$0xff]
    %v216 = vld [vmem:[#allocation7 + $0x60] sm:$0xff]
    %v217 = vld [vmem:[#allocation7 + $0x68] sm:$0xff]
    %v218 = vld [vmem:[#allocation7 + $0x70] sm:$0xff]
    %v219 = vld [vmem:[#allocation7 + $0x78] sm:$0xff]
    %v220 = vld [vmem:[%s6] sm:$0x1]
    %v222 = vlaneseq
    %v223 = vshrl.u32 %v222, 7
    %v224 = vsub.s32 0, %v223
    %v225 = vrot.slane %v220, %v224
    %227 = vmatprep.subr.mxu0 0.0
    %228 = vmatpush1.msra.mxu0 %v204
    %229 = vmatprep.subr.mxu0 0.0
    %230 = vmatpush1.msra.mxu0 %v205
    %231 = vmatprep.subr.mxu0 0.0
    %232 = vmatpush1.msra.mxu0 %v206
    %233 = vmatprep.subr.mxu0 0.0
    %234 = vmatpush1.msra.mxu0 %v207
    %235 = vmatprep.subr.mxu0 0.0
    %236 = vmatpush1.msra.mxu0 %v208
    %237 = vmatprep.subr.mxu0 0.0
    %238 = vmatpush1.msra.mxu0 %v209
    %239 = vmatprep.subr.mxu0 0.0
    %240 = vmatpush1.msra.mxu0 %v210
    %241 = vmatprep.subr.mxu0 0.0
    %242 = vmatpush1.msra.mxu0 %v211
    %243 = vmatprep.subr.mxu0 0.0
    %244 = vmatpush1.msra.mxu0 %v212
    %245 = vmatprep.subr.mxu0 0.0
    %246 = vmatpush1.msra.mxu0 %v213
    %247 = vmatprep.subr.mxu0 0.0
    %248 = vmatpush1.msra.mxu0 %v214
    %249 = vmatprep.subr.mxu0 0.0
    %250 = vmatpush1.msra.mxu0 %v215
    %251 = vmatprep.subr.mxu0 0.0
    %252 = vmatpush1.msra.mxu0 %v216
    %253 = vmatprep.subr.mxu0 0.0
    %254 = vmatpush1.msra.mxu0 %v217
    %255 = vmatprep.subr.mxu0 0.0
    %256 = vmatpush1.msra.mxu0 %v218
    %257 = vmatprep.subr.mxu0 0.0
    %258 = vmatpush1.msra.mxu0 %v219
    %259 = vmatprep.subr.mxu0 0.0
    %260 = vmatpush1.msra.mxu0 0.0
    %261 = vmatprep.subr.mxu0 0.0
    %262 = vmatpush1.msra.mxu0 0.0
    %263 = vmatprep.subr.mxu0 0.0
    %264 = vmatpush1.msra.mxu0 0.0
    %265 = vmatprep.subr.mxu0 0.0
    %266 = vmatpush1.msra.mxu0 0.0
    %267 = vmatprep.subr.mxu0 0.0
    %268 = vmatpush1.msra.mxu0 0.0
    %269 = vmatprep.subr.mxu0 0.0
    %270 = vmatpush1.msra.mxu0 0.0
    %271 = vmatprep.subr.mxu0 0.0
    %272 = vmatpush1.msra.mxu0 0.0
    %273 = vmatprep.subr.mxu0 0.0
    %274 = vmatpush1.msra.mxu0 0.0
    %275 = vmatprep.subr.mxu0 0.0
    %276 = vmatpush1.msra.mxu0 0.0
    %277 = vmatprep.subr.mxu0 0.0
    %278 = vmatpush1.msra.mxu0 0.0
    %279 = vmatprep.subr.mxu0 0.0
    %280 = vmatpush1.msra.mxu0 0.0
    %281 = vmatprep.subr.mxu0 0.0
    %282 = vmatpush1.msra.mxu0 0.0
    %283 = vmatprep.subr.mxu0 0.0
    %284 = vmatpush1.msra.mxu0 0.0
    %285 = vmatprep.subr.mxu0 0.0
    %286 = vmatpush1.msra.mxu0 0.0
    %287 = vmatprep.subr.mxu0 0.0
    %288 = vmatpush1.msra.mxu0 0.0
    %289 = vmatprep.subr.mxu0 0.0
    %290 = vmatpush1.msra.mxu0 0.0
    %291 = vmatprep.mubr.f32.mxu0 0.0
    %292 = vmatmul.mubr.f32.gmra.mrb[0].mxu0 %v203
    %v293 = vpop.f32.mrb[0].mxu0
    %v294 = vadd.f32 %v225, %v293
    %v295 = vpop.f32.mrb[0].mxu0
    %296 = vdwg.mxu0
    %v297 = vld [vmem:[%s7] sm:$0x1]
    %v298 = vld [vmem:[%s8] sm:$0x1]
    %v299 = vrot.slane %v294, 4
    %v300 = vadd.f32 %v294, %v299
    %v301 = vrot.slane %v300, 2
    %v302 = vadd.f32 %v300, %v301
    %v303 = vrot.slane %v302, 1
    %v304 = vadd.f32 %v302, %v303
    %v305 = vmul.f32 %v304, 0.125
    %v306 = vsub.f32 %v294, %v305
    %v307 = vmul.f32 %v306, %v306
    %v308 = vrot.slane %v307, 4
    %v309 = vadd.f32 %v307, %v308
    %v310 = vrot.slane %v309, 2
    %v311 = vadd.f32 %v309, %v310
    %v312 = vrot.slane %v311, 1
    %v313 = vadd.f32 %v311, %v312
    %v314 = vmul.f32 %v313, 0.125
    %v315 = vadd.f32 %v314, 1e-05
    %v316 = vrsqrt.pop %v315
    %v317 = vmul.f32 %v306, %v316
    %v319 = vlaneseq
    %v320 = vshrl.u32 %v319, 7
    %v321 = vsub.s32 0, %v320
    %v322 = vrot.slane %v297, %v321
    %v324 = vmul.f32 %v317, %v322
    %v326 = vlaneseq
    %v327 = vshrl.u32 %v326, 7
    %v328 = vsub.s32 0, %v327
    %v329 = vrot.slane %v298, %v328
    %v331 = vadd.f32 %v324, %v329
    %vm332 = vcmp.ge.f32.partialorder %v331, 0.0
    %v333 = vmul.f32 %v331, 0.25
    %v334 = vsel %vm332, %v331, %v333
    %335 = vst [vmem:[#allocation8] sm:$0xff] %v334
    // Predicated region
    $region50: #{tpu_custom_call.1} parent=1 // pred_check
      _
    $region51: #{tpu_custom_call.1} parent=1 // pred_check_branch
      %337 = sbr.rel (0) target = $region53
    $region52: #{tpu_custom_call.1} parent=1 // pred_region
      %s339 = ssub.s32 128, 128
      %340 = vsyncadd [#allocation4], %s339
      %s342 = sshll.u32 [#allocation8], 4
      %s343 = int_to_ptr.vmem [resolvable:$true] %s342
      %345 = dma.vmem_to_hbm [thread:$0]  %s343, 128, %s9, [#allocation4]
    $region53: #{tpu_custom_call.1} parent=1 // pred_fallthru
      _
    // Predicated region
    $region54: #{tpu_custom_call.1} parent=1 // pred_check
      _
    $region55: #{tpu_custom_call.1} parent=1 // pred_check_branch
      %347 = sbr.rel (0) target = $region57
    $region56: #{tpu_custom_call.1} parent=1 // pred_region
      %348 = dma.done [#allocation4], 128
    $region57: #{tpu_custom_call.1} parent=1 // pred_fallthru
      _
    %349 = vsyncpa [#allocation3], 1
    %350 = vsyncpa [#allocation6], 1
    %351 = vsyncpa [#allocation4], 1

</llo_original>
